<compile_context>
chip_gen: v6e
topology: v6e:2x2x1
jax: 0.10.0
libtpu: 0.0.40
codegen_flags: <defaults>
</compile_context>

<pallas_src>
import functools

import jax
import jax.numpy as jnp
from jax.experimental import pallas as pl
from jax.experimental.pallas import tpu as pltpu

_LANE = 128


def _round_up(n, m):
    return ((n + m - 1) // m) * m


def prepare_params(params, pad_to=_LANE):
    """One-time prep (hoisted out of the per-call path).

    Zero-pads every Linear to lane-aligned dims; weights -> bf16 (MXU operand
    dtype), biases stay f32 (VPU add dtype).  Returns a tuple of (W, b) pairs.
    """
    padded = []
    for w, b in params:
        fi, fo = w.shape
        fip, fop = _round_up(fi, pad_to), _round_up(fo, pad_to)
        wp = (jnp.zeros((fip, fop), jnp.float32)
              .at[:fi, :fo].set(w.astype(jnp.float32))
              .astype(jnp.bfloat16))
        bp = jnp.zeros((1, fop), jnp.float32).at[0, :fo].set(
            b.astype(jnp.float32).reshape(-1))
        padded.append((wp, bp))
    return tuple(padded)


def _pick_tile_b(B):
    if B <= 8:
        return B
    # >= 4 grid steps when possible (2 per v7x TensorCore), 8-row aligned,
    # capped at 512 rows: amortizes per-step overhead while staying small in VMEM.
    return max(8, min(512, _round_up(pl.cdiv(B, 4), 8)))


def _pad_lanes(v, target):
    """Zero-pad the last (lane) dim of an in-kernel value up to `target`."""
    pad = target - v.shape[-1]
    if pad == 0:
        return v
    zeros = jnp.zeros(v.shape[:-1] + (pad,), v.dtype)
    return jnp.concatenate([v, zeros], axis=-1)


def _make_kernel(tile_b, num_subtiles, Dp):
    sub = tile_b // num_subtiles

    def kernel(x_ref, w0, b0, w1, b1, w2, b2, w3, b3, o_ref):
        hidden_layers = ((w0, b0), (w1, b1), (w2, b2))
        # Two independent row sub-tiles with the layer chain interleaved across
        # them: sub-tile A's matmul (MXU, vector-extended slot) overlaps
        # sub-tile B's bias+ReLU+bf16-cast epilogue (VALU slots).
        h = [
            _pad_lanes(x_ref[pl.ds(s * sub, sub), :].astype(jnp.bfloat16), Dp)
            for s in range(num_subtiles)
        ]
        for w_ref, b_ref in hidden_layers:
            w = w_ref[...]
            b = b_ref[...]
            acc = [jnp.dot(h[s], w, preferred_element_type=jnp.float32)
                   for s in range(num_subtiles)]
            h = [jnp.maximum(acc[s] + b, 0.0).astype(jnp.bfloat16)
                 for s in range(num_subtiles)]
        w = w3[...]
        b = b3[...]
        for s in range(num_subtiles):
            acc = jnp.dot(h[s], w, preferred_element_type=jnp.float32)
            # Residual: re-read from the resident input buffer instead of
            # keeping an f32 copy live across the whole chain.
            res = _pad_lanes(
                x_ref[pl.ds(s * sub, sub), :].astype(jnp.float32), Dp)
            o_ref[pl.ds(s * sub, sub), :] = (acc + b + res).astype(o_ref.dtype)

    return kernel


def _vmem_limit_bytes(tile_b, D, Dp, max_dim, param_bytes, out_itemsize):
    act = (2 * tile_b * D * 4                     # double-buffered input tile
           + 2 * tile_b * Dp * out_itemsize       # double-buffered output tile
           + tile_b * max_dim * (4 * 3 + 2 * 2))  # live f32/bf16 intermediates
    want = param_bytes + act + (4 << 20)          # headroom for compiler scratch
    try:
        phys = pltpu.get_tpu_info().vmem_capacity_bytes
    except Exception:
        phys = 64 << 20                           # v7x worst case
    cap = min(32 << 20, phys // 2)                # leave room for XLA's own scratch
    return int(min(cap, max(16 << 20, want)))


@functools.partial(jax.jit, static_argnames=("out_dtype",))
def resnet_block(x, padded_params, *, out_dtype=None):
    """x: (B, D).  padded_params: output of prepare_params() (4 (W, b) pairs).

    out_dtype: set to jnp.bfloat16 to halve output writeback traffic (helps v5e)
    if downstream tolerates bf16; defaults to x.dtype.
    """
    B, D = x.shape
    out_dtype = x.dtype if out_dtype is None else out_dtype
    Dp = padded_params[0][0].shape[0]

    tile_b = _pick_tile_b(B)
    num_subtiles = 2 if (tile_b >= 16 and tile_b % 16 == 0) else 1
    Bp = _round_up(B, tile_b)
    grid = (Bp // tile_b,)

    x = x if x.dtype == jnp.float32 else x.astype(jnp.float32)
    x_in = x if Bp == B else jnp.pad(x, ((0, Bp - B), (0, 0)))

    # Input stays unpadded in the feature dim (full last dim is a legal block);
    # lanes are padded to Dp inside the kernel.
    in_specs = [pl.BlockSpec((tile_b, D), lambda i: (i, 0))]
    flat_args = [x_in]
    for w, b in padded_params:
        # Grid-invariant weights/biases: single-buffer them (they are never
        # re-fetched across steps; double-buffering only wastes VMEM).
        in_specs.append(pl.BlockSpec(w.shape, lambda i: (0, 0),
                                     pipeline_mode=pl.Buffered(1)))
        in_specs.append(pl.BlockSpec(b.shape, lambda i: (0, 0),
                                     pipeline_mode=pl.Buffered(1)))
        flat_args += [w, b]

    param_bytes = sum(w.size * w.dtype.itemsize + b.size * b.dtype.itemsize
                      for w, b in padded_params)
    max_dim = max(w.shape[1] for w, _ in padded_params)
    out_itemsize = jnp.dtype(out_dtype).itemsize
    vmem_limit = _vmem_limit_bytes(tile_b, D, Dp, max_dim, param_bytes,
                                   out_itemsize)

    flops = 2 * Bp * sum(w.shape[0] * w.shape[1] for w, _ in padded_params)
    bytes_accessed = x_in.size * 4 + Bp * Dp * out_itemsize + param_bytes

    out = pl.pallas_call(
        _make_kernel(tile_b, num_subtiles, Dp),
        out_shape=jax.ShapeDtypeStruct((Bp, Dp), out_dtype),
        grid=grid,
        in_specs=in_specs,
        out_specs=pl.BlockSpec((tile_b, Dp), lambda i: (i, 0)),
        compiler_params=pltpu.CompilerParams(
            dimension_semantics=("parallel",),
            vmem_limit_bytes=vmem_limit),
        cost_estimate=pl.CostEstimate(flops=flops, transcendentals=0,
                                      bytes_accessed=bytes_accessed),
    )(*flat_args)
    return out[:B, :D]


def init_params(key, input_dim, forward_layers):
    """Deterministic init mimicking nn.Linear default U(-1/sqrt(fan_in), 1/sqrt(fan_in))."""
    dims = [input_dim] + list(forward_layers) + [input_dim]
    params = []
    for i in range(len(dims) - 1):
        fan_in, fan_out = dims[i], dims[i + 1]
        key, kw, kb = jax.random.split(key, 3)
        bound = 1.0 / jnp.sqrt(fan_in)
        w = jax.random.uniform(kw, (fan_in, fan_out), jnp.float32, -bound, bound)
        b = jax.random.uniform(kb, (fan_out,), jnp.float32, -bound, bound)
        params.append((w, b))
    return params


def resnet_block_ref_f32(x, params):
    """Pure-JAX f32 reference (exact PyTorch semantics)."""
    h = x
    for w, b in params[:-1]:
        h = jnp.maximum(h @ w + b, 0.0)
    w, b = params[-1]
    return h @ w + b + x


def resnet_block_ref_bf16(x, params):
    """Pure-JAX reference emulating kernel numerics: bf16 MXU operands, f32 accumulation."""
    h = x.astype(jnp.bfloat16)
    for w, b in params[:-1]:
        a = jnp.dot(h, w.astype(jnp.bfloat16), preferred_element_type=jnp.float32) + b
        h = jnp.maximum(a, 0.0).astype(jnp.bfloat16)
    w, b = params[-1]
    a = jnp.dot(h, w.astype(jnp.bfloat16), preferred_element_type=jnp.float32) + b
    return a + x


if __name__ == "__main__":
    key = jax.random.PRNGKey(0)
    kx, kp = jax.random.split(key)

    batch = 256
    input_dim = 32
    forward_layers = [64, 64, 64]   # small stand-in for the default [300, 300, 300]

    x = jax.random.normal(kx, (batch, input_dim), jnp.float32)
    params = init_params(kp, input_dim, forward_layers)

    padded = prepare_params(params)                          # one-time prep (hoisted)
    out = jax.block_until_ready(resnet_block(x, padded))     # compiles
    out = jax.block_until_ready(resnet_block(x, padded))     # steady state: single jitted dispatch
    assert out.shape == (batch, input_dim)
    assert out.dtype == x.dtype

    # Tight check against a reference with identical numerics (bf16 MXU, f32 acc).
    ref_bf16 = resnet_block_ref_bf16(x, params)
    assert jnp.allclose(out, ref_bf16, atol=2e-3, rtol=2e-3), "mismatch vs bf16 reference"

    # Loose check against the exact f32 PyTorch-equivalent reference.
    ref_f32 = resnet_block_ref_f32(x, params)
    assert jnp.allclose(out, ref_f32, atol=5e-2, rtol=5e-2), "mismatch vs f32 reference"

    print("KERNEL_OK")
</pallas_src>

<mosaic_0001>
module attributes {stable_mosaic.version = 11 : i64} {
  func.func @kernel(%arg0: i32, %arg1: memref<64x32xf32, #tpu.memory_space<vmem>>, %arg2: memref<128x128xbf16, #tpu.memory_space<vmem>>, %arg3: memref<1x128xf32, #tpu.memory_space<vmem>>, %arg4: memref<128x128xbf16, #tpu.memory_space<vmem>>, %arg5: memref<1x128xf32, #tpu.memory_space<vmem>>, %arg6: memref<128x128xbf16, #tpu.memory_space<vmem>>, %arg7: memref<1x128xf32, #tpu.memory_space<vmem>>, %arg8: memref<128x128xbf16, #tpu.memory_space<vmem>>, %arg9: memref<1x128xf32, #tpu.memory_space<vmem>>, %arg10: memref<64x128xf32, #tpu.memory_space<vmem>>) attributes {dimension_semantics = [#tpu.dimension_semantics<parallel>], iteration_bounds = array<i64: 4>, scalar_prefetch = 0 : i64, scratch_operands = 0 : i64, tpu.core_type = #tpu.core_type<tc>, window_params = [{transform_indices = @transform_0, window_bounds = array<i64: 64, 32>}, {pipeline_mode = #tpu.pipeline_mode<synchronous>, transform_indices = @transform_1, window_bounds = array<i64: 128, 128>}, {pipeline_mode = #tpu.pipeline_mode<synchronous>, transform_indices = @transform_2, window_bounds = array<i64: 1, 128>}, {pipeline_mode = #tpu.pipeline_mode<synchronous>, transform_indices = @transform_3, window_bounds = array<i64: 128, 128>}, {pipeline_mode = #tpu.pipeline_mode<synchronous>, transform_indices = @transform_4, window_bounds = array<i64: 1, 128>}, {pipeline_mode = #tpu.pipeline_mode<synchronous>, transform_indices = @transform_5, window_bounds = array<i64: 128, 128>}, {pipeline_mode = #tpu.pipeline_mode<synchronous>, transform_indices = @transform_6, window_bounds = array<i64: 1, 128>}, {pipeline_mode = #tpu.pipeline_mode<synchronous>, transform_indices = @transform_7, window_bounds = array<i64: 128, 128>}, {pipeline_mode = #tpu.pipeline_mode<synchronous>, transform_indices = @transform_8, window_bounds = array<i64: 1, 128>}, {transform_indices = @transform_9, window_bounds = array<i64: 64, 128>}]} {
    %c0 = arith.constant 0 : index
    %c0_0 = arith.constant 0 : index
    %0 = vector.load %arg1[%c0, %c0_0] : memref<64x32xf32, #tpu.memory_space<vmem>>, vector<32x32xf32>
    %1 = arith.truncf %0 : vector<32x32xf32> to vector<32x32xbf16>
    %cst = arith.constant 0.000000e+00 : bf16
    %2 = vector.broadcast %cst : bf16 to vector<32x96xbf16>
    %3 = tpu.concatenate %1, %2 in 1 : vector<32x32xbf16>, vector<32x96xbf16> -> vector<32x128xbf16>
    %c32 = arith.constant 32 : index
    %c0_1 = arith.constant 0 : index
    %4 = vector.load %arg1[%c32, %c0_1] : memref<64x32xf32, #tpu.memory_space<vmem>>, vector<32x32xf32>
    %5 = arith.truncf %4 : vector<32x32xf32> to vector<32x32xbf16>
    %cst_2 = arith.constant 0.000000e+00 : bf16
    %6 = vector.broadcast %cst_2 : bf16 to vector<32x96xbf16>
    %7 = tpu.concatenate %5, %6 in 1 : vector<32x32xbf16>, vector<32x96xbf16> -> vector<32x128xbf16>
    %c0_3 = arith.constant 0 : index
    %c0_4 = arith.constant 0 : index
    %8 = vector.load %arg2[%c0_3, %c0_4] : memref<128x128xbf16, #tpu.memory_space<vmem>>, vector<128x128xbf16>
    %c0_5 = arith.constant 0 : index
    %c0_6 = arith.constant 0 : index
    %9 = vector.load %arg3[%c0_5, %c0_6] : memref<1x128xf32, #tpu.memory_space<vmem>>, vector<1x128xf32>
    %cst_7 = arith.constant dense<0.000000e+00> : vector<32x128xf32>
    %10 = tpu.matmul %3, %8, %cst_7 {dimension_numbers = #tpu.dot_dimension_numbers<[1], [0], [0], [1], [0, 0, 1, 1], [], []>} : vector<32x128xbf16>, vector<128x128xbf16>, vector<32x128xf32> -> vector<32x128xf32>
    %cst_8 = arith.constant dense<0.000000e+00> : vector<32x128xf32>
    %11 = tpu.matmul %7, %8, %cst_8 {dimension_numbers = #tpu.dot_dimension_numbers<[1], [0], [0], [1], [0, 0, 1, 1], [], []>} : vector<32x128xbf16>, vector<128x128xbf16>, vector<32x128xf32> -> vector<32x128xf32>
    %12 = vector.broadcast %9 : vector<1x128xf32> to vector<32x128xf32>
    %13 = arith.addf %10, %12 : vector<32x128xf32>
    %cst_9 = arith.constant 0.000000e+00 : f32
    %14 = vector.broadcast %cst_9 : f32 to vector<32x128xf32>
    %15 = arith.maximumf %13, %14 : vector<32x128xf32>
    %16 = arith.truncf %15 : vector<32x128xf32> to vector<32x128xbf16>
    %17 = vector.broadcast %9 : vector<1x128xf32> to vector<32x128xf32>
    %18 = arith.addf %11, %17 : vector<32x128xf32>
    %cst_10 = arith.constant 0.000000e+00 : f32
    %19 = vector.broadcast %cst_10 : f32 to vector<32x128xf32>
    %20 = arith.maximumf %18, %19 : vector<32x128xf32>
    %21 = arith.truncf %20 : vector<32x128xf32> to vector<32x128xbf16>
    %c0_11 = arith.constant 0 : index
    %c0_12 = arith.constant 0 : index
    %22 = vector.load %arg4[%c0_11, %c0_12] : memref<128x128xbf16, #tpu.memory_space<vmem>>, vector<128x128xbf16>
    %c0_13 = arith.constant 0 : index
    %c0_14 = arith.constant 0 : index
    %23 = vector.load %arg5[%c0_13, %c0_14] : memref<1x128xf32, #tpu.memory_space<vmem>>, vector<1x128xf32>
    %cst_15 = arith.constant dense<0.000000e+00> : vector<32x128xf32>
    %24 = tpu.matmul %16, %22, %cst_15 {dimension_numbers = #tpu.dot_dimension_numbers<[1], [0], [0], [1], [0, 0, 1, 1], [], []>} : vector<32x128xbf16>, vector<128x128xbf16>, vector<32x128xf32> -> vector<32x128xf32>
    %cst_16 = arith.constant dense<0.000000e+00> : vector<32x128xf32>
    %25 = tpu.matmul %21, %22, %cst_16 {dimension_numbers = #tpu.dot_dimension_numbers<[1], [0], [0], [1], [0, 0, 1, 1], [], []>} : vector<32x128xbf16>, vector<128x128xbf16>, vector<32x128xf32> -> vector<32x128xf32>
    %26 = vector.broadcast %23 : vector<1x128xf32> to vector<32x128xf32>
    %27 = arith.addf %24, %26 : vector<32x128xf32>
    %cst_17 = arith.constant 0.000000e+00 : f32
    %28 = vector.broadcast %cst_17 : f32 to vector<32x128xf32>
    %29 = arith.maximumf %27, %28 : vector<32x128xf32>
    %30 = arith.truncf %29 : vector<32x128xf32> to vector<32x128xbf16>
    %31 = vector.broadcast %23 : vector<1x128xf32> to vector<32x128xf32>
    %32 = arith.addf %25, %31 : vector<32x128xf32>
    %cst_18 = arith.constant 0.000000e+00 : f32
    %33 = vector.broadcast %cst_18 : f32 to vector<32x128xf32>
    %34 = arith.maximumf %32, %33 : vector<32x128xf32>
    %35 = arith.truncf %34 : vector<32x128xf32> to vector<32x128xbf16>
    %c0_19 = arith.constant 0 : index
    %c0_20 = arith.constant 0 : index
    %36 = vector.load %arg6[%c0_19, %c0_20] : memref<128x128xbf16, #tpu.memory_space<vmem>>, vector<128x128xbf16>
    %c0_21 = arith.constant 0 : index
    %c0_22 = arith.constant 0 : index
    %37 = vector.load %arg7[%c0_21, %c0_22] : memref<1x128xf32, #tpu.memory_space<vmem>>, vector<1x128xf32>
    %cst_23 = arith.constant dense<0.000000e+00> : vector<32x128xf32>
    %38 = tpu.matmul %30, %36, %cst_23 {dimension_numbers = #tpu.dot_dimension_numbers<[1], [0], [0], [1], [0, 0, 1, 1], [], []>} : vector<32x128xbf16>, vector<128x128xbf16>, vector<32x128xf32> -> vector<32x128xf32>
    %cst_24 = arith.constant dense<0.000000e+00> : vector<32x128xf32>
    %39 = tpu.matmul %35, %36, %cst_24 {dimension_numbers = #tpu.dot_dimension_numbers<[1], [0], [0], [1], [0, 0, 1, 1], [], []>} : vector<32x128xbf16>, vector<128x128xbf16>, vector<32x128xf32> -> vector<32x128xf32>
    %40 = vector.broadcast %37 : vector<1x128xf32> to vector<32x128xf32>
    %41 = arith.addf %38, %40 : vector<32x128xf32>
    %cst_25 = arith.constant 0.000000e+00 : f32
    %42 = vector.broadcast %cst_25 : f32 to vector<32x128xf32>
    %43 = arith.maximumf %41, %42 : vector<32x128xf32>
    %44 = arith.truncf %43 : vector<32x128xf32> to vector<32x128xbf16>
    %45 = vector.broadcast %37 : vector<1x128xf32> to vector<32x128xf32>
    %46 = arith.addf %39, %45 : vector<32x128xf32>
    %cst_26 = arith.constant 0.000000e+00 : f32
    %47 = vector.broadcast %cst_26 : f32 to vector<32x128xf32>
    %48 = arith.maximumf %46, %47 : vector<32x128xf32>
    %49 = arith.truncf %48 : vector<32x128xf32> to vector<32x128xbf16>
    %c0_27 = arith.constant 0 : index
    %c0_28 = arith.constant 0 : index
    %50 = vector.load %arg8[%c0_27, %c0_28] : memref<128x128xbf16, #tpu.memory_space<vmem>>, vector<128x128xbf16>
    %c0_29 = arith.constant 0 : index
    %c0_30 = arith.constant 0 : index
    %51 = vector.load %arg9[%c0_29, %c0_30] : memref<1x128xf32, #tpu.memory_space<vmem>>, vector<1x128xf32>
    %cst_31 = arith.constant dense<0.000000e+00> : vector<32x128xf32>
    %52 = tpu.matmul %44, %50, %cst_31 {dimension_numbers = #tpu.dot_dimension_numbers<[1], [0], [0], [1], [0, 0, 1, 1], [], []>} : vector<32x128xbf16>, vector<128x128xbf16>, vector<32x128xf32> -> vector<32x128xf32>
    %c0_32 = arith.constant 0 : index
    %c0_33 = arith.constant 0 : index
    %53 = vector.load %arg1[%c0_32, %c0_33] : memref<64x32xf32, #tpu.memory_space<vmem>>, vector<32x32xf32>
    %cst_34 = arith.constant 0.000000e+00 : f32
    %54 = vector.broadcast %cst_34 : f32 to vector<32x96xf32>
    %55 = tpu.concatenate %53, %54 in 1 : vector<32x32xf32>, vector<32x96xf32> -> vector<32x128xf32>
    %56 = vector.broadcast %51 : vector<1x128xf32> to vector<32x128xf32>
    %57 = arith.addf %52, %56 : vector<32x128xf32>
    %58 = arith.addf %57, %55 : vector<32x128xf32>
    %c0_35 = arith.constant 0 : index
    %c0_36 = arith.constant 0 : index
    %59 = vector.load %arg10[%c0_35, %c0_36] : memref<64x128xf32, #tpu.memory_space<vmem>>, vector<32x128xf32>
    tpu.vector_store %arg10[%c0_35, %c0_36], %58 {strides = array<i32>} : memref<64x128xf32, #tpu.memory_space<vmem>>, vector<32x128xf32>,
    %cst_37 = arith.constant dense<0.000000e+00> : vector<32x128xf32>
    %60 = tpu.matmul %49, %50, %cst_37 {dimension_numbers = #tpu.dot_dimension_numbers<[1], [0], [0], [1], [0, 0, 1, 1], [], []>} : vector<32x128xbf16>, vector<128x128xbf16>, vector<32x128xf32> -> vector<32x128xf32>
    %c32_38 = arith.constant 32 : index
    %c0_39 = arith.constant 0 : index
    %61 = vector.load %arg1[%c32_38, %c0_39] : memref<64x32xf32, #tpu.memory_space<vmem>>, vector<32x32xf32>
    %cst_40 = arith.constant 0.000000e+00 : f32
    %62 = vector.broadcast %cst_40 : f32 to vector<32x96xf32>
    %63 = tpu.concatenate %61, %62 in 1 : vector<32x32xf32>, vector<32x96xf32> -> vector<32x128xf32>
    %64 = vector.broadcast %51 : vector<1x128xf32> to vector<32x128xf32>
    %65 = arith.addf %60, %64 : vector<32x128xf32>
    %66 = arith.addf %65, %63 : vector<32x128xf32>
    %c32_41 = arith.constant 32 : index
    %c0_42 = arith.constant 0 : index
    %67 = vector.load %arg10[%c32_41, %c0_42] : memref<64x128xf32, #tpu.memory_space<vmem>>, vector<32x128xf32>
    tpu.vector_store %arg10[%c32_41, %c0_42], %66 {strides = array<i32>} : memref<64x128xf32, #tpu.memory_space<vmem>>, vector<32x128xf32>,
    return
  }
  func.func @transform_0(%arg0: i32) -> (i32, i32) {
    %c0_i32 = arith.constant 0 : i32
    %c0_i32_0 = arith.constant 0 : i32
    return %arg0, %c0_i32 : i32, i32
  }
  func.func @transform_1(%arg0: i32) -> (i32, i32) {
    %c0_i32 = arith.constant 0 : i32
    %c0_i32_0 = arith.constant 0 : i32
    %c0_i32_1 = arith.constant 0 : i32
    return %c0_i32, %c0_i32_0 : i32, i32
  }
  func.func @transform_2(%arg0: i32) -> (i32, i32) {
    %c0_i32 = arith.constant 0 : i32
    %c0_i32_0 = arith.constant 0 : i32
    %c0_i32_1 = arith.constant 0 : i32
    return %c0_i32, %c0_i32_0 : i32, i32
  }
  func.func @transform_3(%arg0: i32) -> (i32, i32) {
    %c0_i32 = arith.constant 0 : i32
    %c0_i32_0 = arith.constant 0 : i32
    %c0_i32_1 = arith.constant 0 : i32
    return %c0_i32, %c0_i32_0 : i32, i32
  }
  func.func @transform_4(%arg0: i32) -> (i32, i32) {
    %c0_i32 = arith.constant 0 : i32
    %c0_i32_0 = arith.constant 0 : i32
    %c0_i32_1 = arith.constant 0 : i32
    return %c0_i32, %c0_i32_0 : i32, i32
  }
  func.func @transform_5(%arg0: i32) -> (i32, i32) {
    %c0_i32 = arith.constant 0 : i32
    %c0_i32_0 = arith.constant 0 : i32
    %c0_i32_1 = arith.constant 0 : i32
    return %c0_i32, %c0_i32_0 : i32, i32
  }
  func.func @transform_6(%arg0: i32) -> (i32, i32) {
    %c0_i32 = arith.constant 0 : i32
    %c0_i32_0 = arith.constant 0 : i32
    %c0_i32_1 = arith.constant 0 : i32
    return %c0_i32, %c0_i32_0 : i32, i32
  }
  func.func @transform_7(%arg0: i32) -> (i32, i32) {
    %c0_i32 = arith.constant 0 : i32
    %c0_i32_0 = arith.constant 0 : i32
    %c0_i32_1 = arith.constant 0 : i32
    return %c0_i32, %c0_i32_0 : i32, i32
  }
  func.func @transform_8(%arg0: i32) -> (i32, i32) {
    %c0_i32 = arith.constant 0 : i32
    %c0_i32_0 = arith.constant 0 : i32
    %c0_i32_1 = arith.constant 0 : i32
    return %c0_i32, %c0_i32_0 : i32, i32
  }
  func.func @transform_9(%arg0: i32) -> (i32, i32) {
    %c0_i32 = arith.constant 0 : i32
    %c0_i32_0 = arith.constant 0 : i32
    return %arg0, %c0_i32 : i32, i32
  }
}

</mosaic_0001>

<llo_original>
// kernel: resnet_block.1
$region0: #{resnet_block.1}
  #allocation0 [shape = 'u32[]', space=smem, size = 0x4, offset = 0x4, fixed_abs, tag = 'smem constant byte address 0x4 - core index']
  #allocation1 [shape = 'u32[144,128]{1,0:T(1,128)}', space=vmem, size = 0x12000, scoped, tag = 'internal scratch']
  %s0 = inlined_call_operand.vmem [shape: f32[256,32], index: 0, kind: input, shape index: {}]
  %s1 = inlined_call_operand.vmem [shape: bf16[128,128], index: 1, kind: input, shape index: {}]
  %s2 = inlined_call_operand.vmem [shape: f32[1,128], index: 2, kind: input, shape index: {}]
  %s3 = inlined_call_operand.vmem [shape: bf16[128,128], index: 3, kind: input, shape index: {}]
  %s4 = inlined_call_operand.vmem [shape: f32[1,128], index: 4, kind: input, shape index: {}]
  %s5 = inlined_call_operand.vmem [shape: bf16[128,128], index: 5, kind: input, shape index: {}]
  %s6 = inlined_call_operand.vmem [shape: f32[1,128], index: 6, kind: input, shape index: {}]
  %s7 = inlined_call_operand.vmem [shape: bf16[128,128], index: 7, kind: input, shape index: {}]
  %s8 = inlined_call_operand.vmem [shape: f32[1,128], index: 8, kind: input, shape index: {}]
  %s9 = inlined_call_operand.vmem [shape: f32[256,128], index: 9, kind: output, shape index: {}]
  %s10 = sld [smem:[#allocation0]]
  $region69: #{resnet_block.1} parent=0
    _
  %s12 = ssub.s32 1, %s10
  %s13 = scalar_select 0, %s12, %s10
  loop: start=0, step=1, limit=6
  $region2: #{resnet_block.1} parent=0 // loop_pre_header
    _
  $region3: #{resnet_block.1} parent=0 // loop_header
    %s15 = sphi 0, %s19
    %p16 = scmp.ge.s32.totalorder %s15, 6
    %s25 = sphi 0, %s27
    %s28 = sphi 0, %s25
    %s29 = sphi 0, %s28
    %s45 = sphi 0, %s29
    %s49 = sphi 0, %s49
    %s51 = sphi 0, %s49
    %s52 = sphi 0, %s51
    %s66 = sphi 0, %s52
    %s70 = sphi 0, %s70
    %s72 = sphi 0, %s70
    %s73 = sphi 0, %s72
    %s87 = sphi 0, %s73
    %s91 = sphi 0, %s91
    %s93 = sphi 0, %s91
    %s94 = sphi 0, %s93
    %s108 = sphi 0, %s94
    %s112 = sphi 0, %s112
    %s114 = sphi 0, %s112
    %s115 = sphi 0, %s114
    %s129 = sphi 0, %s115
    %s133 = sphi 0, %s133
    %s135 = sphi 0, %s133
    %s136 = sphi 0, %s135
    %s150 = sphi 0, %s136
    %s154 = sphi 0, %s154
    %s156 = sphi 0, %s154
    %s157 = sphi 0, %s156
    %s171 = sphi 0, %s157
    %s175 = sphi 0, %s175
    %s177 = sphi 0, %s175
    %s178 = sphi 0, %s177
    %s192 = sphi 0, %s178
    %s196 = sphi 0, %s196
    %s198 = sphi 0, %s196
    %s199 = sphi 0, %s198
    %s213 = sphi 0, %s199
    %s219 = sphi 0, %s221
    %s222 = sphi 0, %s219
    %s223 = sphi 0, %s222
    %s239 = sphi 0, %s223
  $region4: #{resnet_block.1} parent=0 // loop_header_branch
    %18 = sbr.rel (%p16) target = $region8
  $region5: #{resnet_block.1} parent=0 // loop_body
    %s20 = ssub.s32 %s15, 1
    %s21 = ssub.s32 %s15, 2
    %s22 = sadd.s32 %s15, 1
    %s23 = ssub.s32 %s15, %s22
    %p24 = scmp.eq.s32.totalorder %s23, 0
    %s26 = sadd.s32 %s25, 1
    %s27 = scalar_select %p24, %s25, %s26
    %p30 = pneg %p24
    %p31 = scmp.eq.s32.totalorder %s15, 3
    %p32 = por %p30, %p31
    %p33 = scmp.ne.s32.totalorder %s25, %s28
    %p34 = scmp.eq.s32.totalorder %s15, 0
    %p35 = por %p33, %p34
    %p36 = scmp.ne.s32.totalorder %s25, %s28
    %p37 = scmp.eq.s32.totalorder %s20, 3
    %p38 = por %p36, %p37
    %p39 = scmp.ne.s32.totalorder %s28, %s29
    %p40 = scmp.eq.s32.totalorder %s20, 0
    %p41 = por %p39, %p40
    %p42 = scmp.ne.s32.totalorder %s28, %s29
    %p43 = scmp.eq.s32.totalorder %s21, 3
    %p44 = por %p42, %p43
    %p46 = scmp.ne.s32.totalorder %s29, %s45
    %p47 = scmp.eq.s32.totalorder %s21, 0
    %p48 = por %p46, %p47
    %s50 = sadd.s32 %s49, 1
    %p53 = scmp.eq.s32.totalorder %s15, 3
    %p54 = scmp.ne.s32.totalorder %s49, %s51
    %p55 = scmp.eq.s32.totalorder %s15, 0
    %p56 = por %p54, %p55
    %p57 = scmp.ne.s32.totalorder %s49, %s51
    %p58 = scmp.eq.s32.totalorder %s20, 3
    %p59 = por %p57, %p58
    %p60 = scmp.ne.s32.totalorder %s51, %s52
    %p61 = scmp.eq.s32.totalorder %s20, 0
    %p62 = por %p60, %p61
    %p63 = scmp.ne.s32.totalorder %s51, %s52
    %p64 = scmp.eq.s32.totalorder %s21, 3
    %p65 = por %p63, %p64
    %p67 = scmp.ne.s32.totalorder %s52, %s66
    %p68 = scmp.eq.s32.totalorder %s21, 0
    %p69 = por %p67, %p68
    %s71 = sadd.s32 %s70, 1
    %p74 = scmp.eq.s32.totalorder %s15, 3
    %p75 = scmp.ne.s32.totalorder %s70, %s72
    %p76 = scmp.eq.s32.totalorder %s15, 0
    %p77 = por %p75, %p76
    %p78 = scmp.ne.s32.totalorder %s70, %s72
    %p79 = scmp.eq.s32.totalorder %s20, 3
    %p80 = por %p78, %p79
    %p81 = scmp.ne.s32.totalorder %s72, %s73
    %p82 = scmp.eq.s32.totalorder %s20, 0
    %p83 = por %p81, %p82
    %p84 = scmp.ne.s32.totalorder %s72, %s73
    %p85 = scmp.eq.s32.totalorder %s21, 3
    %p86 = por %p84, %p85
    %p88 = scmp.ne.s32.totalorder %s73, %s87
    %p89 = scmp.eq.s32.totalorder %s21, 0
    %p90 = por %p88, %p89
    %s92 = sadd.s32 %s91, 1
    %p95 = scmp.eq.s32.totalorder %s15, 3
    %p96 = scmp.ne.s32.totalorder %s91, %s93
    %p97 = scmp.eq.s32.totalorder %s15, 0
    %p98 = por %p96, %p97
    %p99 = scmp.ne.s32.totalorder %s91, %s93
    %p100 = scmp.eq.s32.totalorder %s20, 3
    %p101 = por %p99, %p100
    %p102 = scmp.ne.s32.totalorder %s93, %s94
    %p103 = scmp.eq.s32.totalorder %s20, 0
    %p104 = por %p102, %p103
    %p105 = scmp.ne.s32.totalorder %s93, %s94
    %p106 = scmp.eq.s32.totalorder %s21, 3
    %p107 = por %p105, %p106
    %p109 = scmp.ne.s32.totalorder %s94, %s108
    %p110 = scmp.eq.s32.totalorder %s21, 0
    %p111 = por %p109, %p110
    %s113 = sadd.s32 %s112, 1
    %p116 = scmp.eq.s32.totalorder %s15, 3
    %p117 = scmp.ne.s32.totalorder %s112, %s114
    %p118 = scmp.eq.s32.totalorder %s15, 0
    %p119 = por %p117, %p118
    %p120 = scmp.ne.s32.totalorder %s112, %s114
    %p121 = scmp.eq.s32.totalorder %s20, 3
    %p122 = por %p120, %p121
    %p123 = scmp.ne.s32.totalorder %s114, %s115
    %p124 = scmp.eq.s32.totalorder %s20, 0
    %p125 = por %p123, %p124
    %p126 = scmp.ne.s32.totalorder %s114, %s115
    %p127 = scmp.eq.s32.totalorder %s21, 3
    %p128 = por %p126, %p127
    %p130 = scmp.ne.s32.totalorder %s115, %s129
    %p131 = scmp.eq.s32.totalorder %s21, 0
    %p132 = por %p130, %p131
    %s134 = sadd.s32 %s133, 1
    %p137 = scmp.eq.s32.totalorder %s15, 3
    %p138 = scmp.ne.s32.totalorder %s133, %s135
    %p139 = scmp.eq.s32.totalorder %s15, 0
    %p140 = por %p138, %p139
    %p141 = scmp.ne.s32.totalorder %s133, %s135
    %p142 = scmp.eq.s32.totalorder %s20, 3
    %p143 = por %p141, %p142
    %p144 = scmp.ne.s32.totalorder %s135, %s136
    %p145 = scmp.eq.s32.totalorder %s20, 0
    %p146 = por %p144, %p145
    %p147 = scmp.ne.s32.totalorder %s135, %s136
    %p148 = scmp.eq.s32.totalorder %s21, 3
    %p149 = por %p147, %p148
    %p151 = scmp.ne.s32.totalorder %s136, %s150
    %p152 = scmp.eq.s32.totalorder %s21, 0
    %p153 = por %p151, %p152
    %s155 = sadd.s32 %s154, 1
    %p158 = scmp.eq.s32.totalorder %s15, 3
    %p159 = scmp.ne.s32.totalorder %s154, %s156
    %p160 = scmp.eq.s32.totalorder %s15, 0
    %p161 = por %p159, %p160
    %p162 = scmp.ne.s32.totalorder %s154, %s156
    %p163 = scmp.eq.s32.totalorder %s20, 3
    %p164 = por %p162, %p163
    %p165 = scmp.ne.s32.totalorder %s156, %s157
    %p166 = scmp.eq.s32.totalorder %s20, 0
    %p167 = por %p165, %p166
    %p168 = scmp.ne.s32.totalorder %s156, %s157
    %p169 = scmp.eq.s32.totalorder %s21, 3
    %p170 = por %p168, %p169
    %p172 = scmp.ne.s32.totalorder %s157, %s171
    %p173 = scmp.eq.s32.totalorder %s21, 0
    %p174 = por %p172, %p173
    %s176 = sadd.s32 %s175, 1
    %p179 = scmp.eq.s32.totalorder %s15, 3
    %p180 = scmp.ne.s32.totalorder %s175, %s177
    %p181 = scmp.eq.s32.totalorder %s15, 0
    %p182 = por %p180, %p181
    %p183 = scmp.ne.s32.totalorder %s175, %s177
    %p184 = scmp.eq.s32.totalorder %s20, 3
    %p185 = por %p183, %p184
    %p186 = scmp.ne.s32.totalorder %s177, %s178
    %p187 = scmp.eq.s32.totalorder %s20, 0
    %p188 = por %p186, %p187
    %p189 = scmp.ne.s32.totalorder %s177, %s178
    %p190 = scmp.eq.s32.totalorder %s21, 3
    %p191 = por %p189, %p190
    %p193 = scmp.ne.s32.totalorder %s178, %s192
    %p194 = scmp.eq.s32.totalorder %s21, 0
    %p195 = por %p193, %p194
    %s197 = sadd.s32 %s196, 1
    %p200 = scmp.eq.s32.totalorder %s15, 3
    %p201 = scmp.ne.s32.totalorder %s196, %s198
    %p202 = scmp.eq.s32.totalorder %s15, 0
    %p203 = por %p201, %p202
    %p204 = scmp.ne.s32.totalorder %s196, %s198
    %p205 = scmp.eq.s32.totalorder %s20, 3
    %p206 = por %p204, %p205
    %p207 = scmp.ne.s32.totalorder %s198, %s199
    %p208 = scmp.eq.s32.totalorder %s20, 0
    %p209 = por %p207, %p208
    %p210 = scmp.ne.s32.totalorder %s198, %s199
    %p211 = scmp.eq.s32.totalorder %s21, 3
    %p212 = por %p210, %p211
    %p214 = scmp.ne.s32.totalorder %s199, %s213
    %p215 = scmp.eq.s32.totalorder %s21, 0
    %p216 = por %p214, %p215
    %s217 = ssub.s32 %s15, %s22
    %p218 = scmp.eq.s32.totalorder %s217, 0
    %s220 = sadd.s32 %s219, 1
    %s221 = scalar_select %p218, %s219, %s220
    %p224 = pneg %p218
    %p225 = scmp.eq.s32.totalorder %s15, 3
    %p226 = por %p224, %p225
    %p227 = scmp.ne.s32.totalorder %s219, %s222
    %p228 = scmp.eq.s32.totalorder %s15, 0
    %p229 = por %p227, %p228
    %p230 = scmp.ne.s32.totalorder %s219, %s222
    %p231 = scmp.eq.s32.totalorder %s20, 3
    %p232 = por %p230, %p231
    %p233 = scmp.ne.s32.totalorder %s222, %s223
    %p234 = scmp.eq.s32.totalorder %s20, 0
    %p235 = por %p233, %p234
    %p236 = scmp.ne.s32.totalorder %s222, %s223
    %p237 = scmp.eq.s32.totalorder %s21, 3
    %p238 = por %p236, %p237
    %p240 = scmp.ne.s32.totalorder %s223, %s239
    %p241 = scmp.eq.s32.totalorder %s21, 0
    %p242 = por %p240, %p241
    %p243 = scmp.le.s32.totalorder 1, %s15
    %p244 = scmp.lt.s32.totalorder %s15, 5
    %p245 = pnand %p243, %p244
    %p246 = pneg %p245
    // Predicated region
    $region9: #{resnet_block.1} parent=5 // pred_check
      _
    $region10: #{resnet_block.1} parent=5 // pred_check_branch
      %248 = sbr.rel (%p245) target = $region12
    $region11: #{resnet_block.1} parent=5 // pred_region
      %s249 = ssub.s32 %s15, 1
      // Predicated region
      $region13: #{resnet_block.1} parent=11 // pred_check
        %p250 = pneg %p62
      $region14: #{resnet_block.1} parent=11 // pred_check_branch
        %252 = sbr.rel (%p250) target = $region16
      $region15: #{resnet_block.1} parent=11 // pred_region
        _
      $region16: #{resnet_block.1} parent=11 // pred_fallthru
        _
      // Predicated region
      $region17: #{resnet_block.1} parent=11 // pred_check
        %p253 = pneg %p83
      $region18: #{resnet_block.1} parent=11 // pred_check_branch
        %255 = sbr.rel (%p253) target = $region20
      $region19: #{resnet_block.1} parent=11 // pred_region
        _
      $region20: #{resnet_block.1} parent=11 // pred_fallthru
        _
      // Predicated region
      $region21: #{resnet_block.1} parent=11 // pred_check
        %p256 = pneg %p104
      $region22: #{resnet_block.1} parent=11 // pred_check_branch
        %258 = sbr.rel (%p256) target = $region24
      $region23: #{resnet_block.1} parent=11 // pred_region
        _
      $region24: #{resnet_block.1} parent=11 // pred_fallthru
        _
      // Predicated region
      $region25: #{resnet_block.1} parent=11 // pred_check
        %p259 = pneg %p125
      $region26: #{resnet_block.1} parent=11 // pred_check_branch
        %261 = sbr.rel (%p259) target = $region28
      $region27: #{resnet_block.1} parent=11 // pred_region
        _
      $region28: #{resnet_block.1} parent=11 // pred_fallthru
        _
      // Predicated region
      $region29: #{resnet_block.1} parent=11 // pred_check
        %p262 = pneg %p146
      $region30: #{resnet_block.1} parent=11 // pred_check_branch
        %264 = sbr.rel (%p262) target = $region32
      $region31: #{resnet_block.1} parent=11 // pred_region
        _
      $region32: #{resnet_block.1} parent=11 // pred_fallthru
        _
      // Predicated region
      $region33: #{resnet_block.1} parent=11 // pred_check
        %p265 = pneg %p167
      $region34: #{resnet_block.1} parent=11 // pred_check_branch
        %267 = sbr.rel (%p265) target = $region36
      $region35: #{resnet_block.1} parent=11 // pred_region
        _
      $region36: #{resnet_block.1} parent=11 // pred_fallthru
        _
      // Predicated region
      $region37: #{resnet_block.1} parent=11 // pred_check
        %p268 = pneg %p188
      $region38: #{resnet_block.1} parent=11 // pred_check_branch
        %270 = sbr.rel (%p268) target = $region40
      $region39: #{resnet_block.1} parent=11 // pred_region
        _
      $region40: #{resnet_block.1} parent=11 // pred_fallthru
        _
      // Predicated region
      $region41: #{resnet_block.1} parent=11 // pred_check
        %p271 = pneg %p209
      $region42: #{resnet_block.1} parent=11 // pred_check_branch
        %273 = sbr.rel (%p271) target = $region44
      $region43: #{resnet_block.1} parent=11 // pred_region
        _
      $region44: #{resnet_block.1} parent=11 // pred_fallthru
        _
    $region12: #{resnet_block.1} parent=5 // pred_fallthru
      _
    %p274 = scmp.lt.s32.totalorder %s15, 4
    // Predicated region
    $region45: #{resnet_block.1} parent=5 // pred_check
      %p275 = pneg %p274
    $region46: #{resnet_block.1} parent=5 // pred_check_branch
      %277 = sbr.rel (%p275) target = $region48
    $region47: #{resnet_block.1} parent=5 // pred_region
      // Predicated region
      $region49: #{resnet_block.1} parent=47 // pred_check
        %p278 = pneg %p35
      $region50: #{resnet_block.1} parent=47 // pred_check_branch
        %280 = sbr.rel (%p278) target = $region52
      $region51: #{resnet_block.1} parent=47 // pred_region
        %s281 = smul.u32 8, %s15
        %p282 = scmp.lt.s32.totalorder %s281, 31
        %s283 = scalar_select %p282, %s281, 31
        %s284 = smul.addr %s283, 8
        %s285 = scalar_lea.vmem %s0, %s284
        %s286 = smul.u32 8, %s15
      $region52: #{resnet_block.1} parent=47 // pred_fallthru
        _
    $region48: #{resnet_block.1} parent=5 // pred_fallthru
      _
    %p287 = scmp.le.s32.totalorder 1, %s15
    %p288 = scmp.lt.s32.totalorder %s15, 5
    %p289 = pnand %p287, %p288
    %p290 = pneg %p289
    // Predicated region
    $region53: #{resnet_block.1} parent=5 // pred_check
      _
    $region54: #{resnet_block.1} parent=5 // pred_check_branch
      %292 = sbr.rel (%p289) target = $region56
    $region55: #{resnet_block.1} parent=5 // pred_region
      %s293 = ssub.s32 %s15, 1
      %s294 = smul.u32 8, %s20
      %p295 = scmp.lt.s32.totalorder %s294, 31
      %s296 = scalar_select %p295, %s294, 31
      %s297 = smul.addr %s296, 8
      %s298 = scalar_lea.vmem %s0, %s297
      %p299 = pneg %p41
      %p300 = pneg %p38
      %p301 = pneg %p62
      %p302 = pneg %p59
      %p303 = pneg %p83
      %p304 = pneg %p80
      %p305 = pneg %p104
      %p306 = pneg %p101
      %p307 = pneg %p125
      %p308 = pneg %p122
      %p309 = pneg %p146
      %p310 = pneg %p143
      %p311 = pneg %p167
      %p312 = pneg %p164
      %p313 = pneg %p188
      %p314 = pneg %p185
      %p315 = pneg %p209
      %p316 = pneg %p206
      %p317 = pneg %p235
      %p318 = pneg %p232
      %s319 = smul.u32 8, %s20
      %p320 = scmp.lt.s32.totalorder %s319, 31
      %s321 = scalar_select %p320, %s319, 31
      %s322 = smul.addr %s321, 8
      %s323 = scalar_lea.vmem %s9, %s322
      %s324 = smul.u32 8, %s20
      %p325 = scmp.lt.s32.totalorder %s324, 31
      %s326 = scalar_select %p325, %s324, 31
      %s327 = smul.addr %s326, 8
      %s328 = scalar_lea.vmem %s0, %s327
      %s329 = smul.u32 8, %s20
      %s330 = smul.u32 8, %s20
      %p331 = scmp.lt.s32.totalorder %s330, 31
      %s332 = scalar_select %p331, %s330, 31
      %s333 = smul.addr %s332, 8
      %s334 = scalar_lea.vmem %s9, %s333
      %s335 = smul.u32 8, %s20
      %v337 = vld [vmem:[%s328] sm:$0xff]
      %v338 = vld [vmem:[%s328 + $0x8] sm:$0xff]
      %v339 = vld [vmem:[%s328 + $0x10] sm:$0xff]
      %v340 = vld [vmem:[%s328 + $0x18] sm:$0xff]
      %v341 = vpack.c.bf16 %v338, %v337
      %v342 = vpack.c.bf16 %v340, %v339
      %vm343 = vcmask 261120
      %v346 = vsel %vm343, %v341, 0
      %v349 = vsel %vm343, %v342, 0
      %v351 = vld [vmem:[%s328 + $0x20] sm:$0xff]
      %v352 = vld [vmem:[%s328 + $0x28] sm:$0xff]
      %v353 = vld [vmem:[%s328 + $0x30] sm:$0xff]
      %v354 = vld [vmem:[%s328 + $0x38] sm:$0xff]
      %v355 = vpack.c.bf16 %v352, %v351
      %v356 = vpack.c.bf16 %v354, %v353
      %v358 = vsel %vm343, %v355, 0
      %v361 = vsel %vm343, %v356, 0
      %v363 = vld [vmem:[%s1] sm:$0xf]
      %v364 = vld [vmem:[%s1 + $0x4] sm:$0xf]
      %v365 = vld [vmem:[%s1 + $0x8] sm:$0xf]
      %v366 = vld [vmem:[%s1 + $0xc] sm:$0xf]
      %v367 = vld [vmem:[%s1 + $0x10] sm:$0xf]
      %v368 = vld [vmem:[%s1 + $0x14] sm:$0xf]
      %v369 = vld [vmem:[%s1 + $0x18] sm:$0xf]
      %v370 = vld [vmem:[%s1 + $0x1c] sm:$0xf]
      %v371 = vld [vmem:[%s1 + $0x20] sm:$0xf]
      %v372 = vld [vmem:[%s1 + $0x24] sm:$0xf]
      %v373 = vld [vmem:[%s1 + $0x28] sm:$0xf]
      %v374 = vld [vmem:[%s1 + $0x2c] sm:$0xf]
      %v375 = vld [vmem:[%s1 + $0x30] sm:$0xf]
      %v376 = vld [vmem:[%s1 + $0x34] sm:$0xf]
      %v377 = vld [vmem:[%s1 + $0x38] sm:$0xf]
      %v378 = vld [vmem:[%s1 + $0x3c] sm:$0xf]
      %v379 = vld [vmem:[%s2] sm:$0x1]
      %v381 = vlaneseq
      %v382 = vshrl.u32 %v381, 7
      %v383 = vsub.s32 0, %v382
      %v384 = vrot.slane %v379, %v383
      %v402 = vunpack.c.l.b16 %v363
      %v403 = vunpack.c.l.b16 %v364
      %v404 = vunpack.c.l.b16 %v365
      %v405 = vunpack.c.l.b16 %v366
      %v406 = vunpack.c.l.b16 %v367
      %v407 = vunpack.c.l.b16 %v368
      %v408 = vunpack.c.l.b16 %v369
      %v409 = vunpack.c.l.b16 %v370
      %v410 = vunpack.c.l.b16 %v371
      %v411 = vunpack.c.l.b16 %v372
      %v412 = vunpack.c.l.b16 %v373
      %v413 = vunpack.c.l.b16 %v374
      %v414 = vunpack.c.l.b16 %v375
      %v415 = vunpack.c.l.b16 %v376
      %v416 = vunpack.c.l.b16 %v377
      %v417 = vunpack.c.l.b16 %v378
      %v418 = vpack.c.b16 %v403, %v402
      %v419 = vpack.c.b16 %v405, %v404
      %v420 = vpack.c.b16 %v407, %v406
      %v421 = vpack.c.b16 %v409, %v408
      %v422 = vpack.c.b16 %v411, %v410
      %v423 = vpack.c.b16 %v413, %v412
      %v424 = vpack.c.b16 %v415, %v414
      %v425 = vpack.c.b16 %v417, %v416
      %434 = vmatprep.subr.bf16.mxu0 0
      %435 = vmatpush1.bf16.msra.mxu0 %v425
      %436 = vmatprep.subr.bf16.mxu0 0
      %437 = vmatpush1.bf16.msra.mxu0 %v424
      %438 = vmatprep.subr.bf16.mxu0 0
      %439 = vmatpush1.bf16.msra.mxu0 %v423
      %440 = vmatprep.subr.bf16.mxu0 0
      %441 = vmatpush1.bf16.msra.mxu0 %v422
      %442 = vmatprep.subr.bf16.mxu0 0
      %443 = vmatpush1.bf16.msra.mxu0 %v421
      %444 = vmatprep.subr.bf16.mxu0 0
      %445 = vmatpush1.bf16.msra.mxu0 %v420
      %446 = vmatprep.subr.bf16.mxu0 0
      %447 = vmatpush1.bf16.msra.mxu0 %v419
      %448 = vmatprep.subr.bf16.mxu0 0
      %449 = vmatpush1.bf16.msra.mxu0 %v418
      %450 = vmatprep.subr.bf16.mxu0 0
      %451 = vmatpush2.bf16.msra.mxu0 0
      %452 = vmatprep.subr.bf16.mxu0 0
      %453 = vmatpush2.bf16.msra.mxu0 0
      %454 = vmatprep.subr.bf16.mxu0 0
      %455 = vmatpush2.bf16.msra.mxu0 0
      %456 = vmatprep.subr.bf16.mxu0 0
      %457 = vmatpush2.bf16.msra.mxu0 0
      %458 = vmatprep.subr.bf16.mxu0 0
      %459 = vmatpush2.bf16.msra.mxu0 0
      %460 = vmatprep.subr.bf16.mxu0 0
      %461 = vmatpush2.bf16.msra.mxu0 0
      %462 = vmatprep.subr.bf16.mxu0 0
      %463 = vmatpush2.bf16.msra.mxu0 0
      %464 = vmatprep.subr.bf16.mxu0 0
      %465 = vmatpush2.bf16.msra.mxu0 0
      %466 = vmatprep.mubr.bf16.mxu0 0
      %467 = vmatmul.mubr.bf16.gmra.mxu0 %v346
      %v468 = vpop.f32.mrf.mxu0
      %v469 = vadd.f32 %v384, %v468
      %v470 = vpop.f32.mrf.mxu0
      %v471 = vpop.f32.mrf.mxu0
      %v472 = vadd.f32 %v384, %v471
      %v473 = vpop.f32.mrf.mxu0
      %474 = vmatprep.mubr.bf16.mxu0 0
      %475 = vmatmul.mubr.bf16.gmra.mxu0 %v349
      %v476 = vpop.f32.mrf.mxu0
      %v477 = vadd.f32 %v384, %v476
      %v478 = vpop.f32.mrf.mxu0
      %v479 = vpop.f32.mrf.mxu0
      %v480 = vadd.f32 %v384, %v479
      %v481 = vpop.f32.mrf.mxu0
      %482 = vdwg.mxu0
      %v483 = vmax.f32 %v469, 0.0
      %v484 = vmax.f32 %v472, 0.0
      %v485 = vmax.f32 %v477, 0.0
      %v486 = vmax.f32 %v480, 0.0
      %v487 = vpack.c.bf16 %v484, %v483
      %v488 = vpack.c.bf16 %v486, %v485
      %489 = vmatprep.subr.bf16.mxu0 0
      %490 = vmatpush1.bf16.msra.mxu0 %v425
      %491 = vmatprep.subr.bf16.mxu0 0
      %492 = vmatpush1.bf16.msra.mxu0 %v424
      %493 = vmatprep.subr.bf16.mxu0 0
      %494 = vmatpush1.bf16.msra.mxu0 %v423
      %495 = vmatprep.subr.bf16.mxu0 0
      %496 = vmatpush1.bf16.msra.mxu0 %v422
      %497 = vmatprep.subr.bf16.mxu0 0
      %498 = vmatpush1.bf16.msra.mxu0 %v421
      %499 = vmatprep.subr.bf16.mxu0 0
      %500 = vmatpush1.bf16.msra.mxu0 %v420
      %501 = vmatprep.subr.bf16.mxu0 0
      %502 = vmatpush1.bf16.msra.mxu0 %v419
      %503 = vmatprep.subr.bf16.mxu0 0
      %504 = vmatpush1.bf16.msra.mxu0 %v418
      %505 = vmatprep.subr.bf16.mxu0 0
      %506 = vmatpush2.bf16.msra.mxu0 0
      %507 = vmatprep.subr.bf16.mxu0 0
      %508 = vmatpush2.bf16.msra.mxu0 0
      %509 = vmatprep.subr.bf16.mxu0 0
      %510 = vmatpush2.bf16.msra.mxu0 0
      %511 = vmatprep.subr.bf16.mxu0 0
      %512 = vmatpush2.bf16.msra.mxu0 0
      %513 = vmatprep.subr.bf16.mxu0 0
      %514 = vmatpush2.bf16.msra.mxu0 0
      %515 = vmatprep.subr.bf16.mxu0 0
      %516 = vmatpush2.bf16.msra.mxu0 0
      %517 = vmatprep.subr.bf16.mxu0 0
      %518 = vmatpush2.bf16.msra.mxu0 0
      %519 = vmatprep.subr.bf16.mxu0 0
      %520 = vmatpush2.bf16.msra.mxu0 0
      %521 = vmatprep.mubr.bf16.mxu0 0
      %522 = vmatmul.mubr.bf16.gmra.mxu0 %v358
      %v523 = vpop.f32.mrf.mxu0
      %v524 = vadd.f32 %v384, %v523
      %v525 = vpop.f32.mrf.mxu0
      %v526 = vpop.f32.mrf.mxu0
      %v527 = vadd.f32 %v384, %v526
      %v528 = vpop.f32.mrf.mxu0
      %529 = vmatprep.mubr.bf16.mxu0 0
      %530 = vmatmul.mubr.bf16.gmra.mxu0 %v361
      %v531 = vpop.f32.mrf.mxu0
      %v532 = vadd.f32 %v384, %v531
      %v533 = vpop.f32.mrf.mxu0
      %v534 = vpop.f32.mrf.mxu0
      %v535 = vadd.f32 %v384, %v534
      %v536 = vpop.f32.mrf.mxu0
      %537 = vdwg.mxu0
      %v538 = vmax.f32 %v524, 0.0
      %v539 = vmax.f32 %v527, 0.0
      %v540 = vmax.f32 %v532, 0.0
      %v541 = vmax.f32 %v535, 0.0
      %v542 = vpack.c.bf16 %v539, %v538
      %v543 = vpack.c.bf16 %v541, %v540
      %v544 = vld [vmem:[%s3] sm:$0xf]
      %v545 = vld [vmem:[%s3 + $0x4] sm:$0xf]
      %v546 = vld [vmem:[%s3 + $0x8] sm:$0xf]
      %v547 = vld [vmem:[%s3 + $0xc] sm:$0xf]
      %v548 = vld [vmem:[%s3 + $0x10] sm:$0xf]
      %v549 = vld [vmem:[%s3 + $0x14] sm:$0xf]
      %v550 = vld [vmem:[%s3 + $0x18] sm:$0xf]
      %v551 = vld [vmem:[%s3 + $0x1c] sm:$0xf]
      %v552 = vld [vmem:[%s3 + $0x20] sm:$0xf]
      %v553 = vld [vmem:[%s3 + $0x24] sm:$0xf]
      %v554 = vld [vmem:[%s3 + $0x28] sm:$0xf]
      %v555 = vld [vmem:[%s3 + $0x2c] sm:$0xf]
      %v556 = vld [vmem:[%s3 + $0x30] sm:$0xf]
      %v557 = vld [vmem:[%s3 + $0x34] sm:$0xf]
      %v558 = vld [vmem:[%s3 + $0x38] sm:$0xf]
      %v559 = vld [vmem:[%s3 + $0x3c] sm:$0xf]
      %v560 = vld [vmem:[%s4] sm:$0x1]
      %v562 = vlaneseq
      %v563 = vshrl.u32 %v562, 7
      %v564 = vsub.s32 0, %v563
      %v565 = vrot.slane %v560, %v564
      %v583 = vunpack.c.l.b16 %v544
      %v584 = vunpack.c.l.b16 %v545
      %v585 = vunpack.c.l.b16 %v546
      %v586 = vunpack.c.l.b16 %v547
      %v587 = vunpack.c.l.b16 %v548
      %v588 = vunpack.c.l.b16 %v549
      %v589 = vunpack.c.l.b16 %v550
      %v590 = vunpack.c.l.b16 %v551
      %v591 = vunpack.c.l.b16 %v552
      %v592 = vunpack.c.l.b16 %v553
      %v593 = vunpack.c.l.b16 %v554
      %v594 = vunpack.c.l.b16 %v555
      %v595 = vunpack.c.l.b16 %v556
      %v596 = vunpack.c.l.b16 %v557
      %v597 = vunpack.c.l.b16 %v558
      %v598 = vunpack.c.l.b16 %v559
      %v599 = vpack.c.b16 %v584, %v583
      %v600 = vpack.c.b16 %v586, %v585
      %v601 = vpack.c.b16 %v588, %v587
      %v602 = vpack.c.b16 %v590, %v589
      %v603 = vpack.c.b16 %v592, %v591
      %v604 = vpack.c.b16 %v594, %v593
      %v605 = vpack.c.b16 %v596, %v595
      %v606 = vpack.c.b16 %v598, %v597
      %615 = vmatprep.subr.bf16.mxu0 0
      %616 = vmatpush1.bf16.msra.mxu0 %v606
      %617 = vmatprep.subr.bf16.mxu0 0
      %618 = vmatpush1.bf16.msra.mxu0 %v605
      %619 = vmatprep.subr.bf16.mxu0 0
      %620 = vmatpush1.bf16.msra.mxu0 %v604
      %621 = vmatprep.subr.bf16.mxu0 0
      %622 = vmatpush1.bf16.msra.mxu0 %v603
      %623 = vmatprep.subr.bf16.mxu0 0
      %624 = vmatpush1.bf16.msra.mxu0 %v602
      %625 = vmatprep.subr.bf16.mxu0 0
      %626 = vmatpush1.bf16.msra.mxu0 %v601
      %627 = vmatprep.subr.bf16.mxu0 0
      %628 = vmatpush1.bf16.msra.mxu0 %v600
      %629 = vmatprep.subr.bf16.mxu0 0
      %630 = vmatpush1.bf16.msra.mxu0 %v599
      %631 = vmatprep.subr.bf16.mxu0 0
      %632 = vmatpush2.bf16.msra.mxu0 0
      %633 = vmatprep.subr.bf16.mxu0 0
      %634 = vmatpush2.bf16.msra.mxu0 0
      %635 = vmatprep.subr.bf16.mxu0 0
      %636 = vmatpush2.bf16.msra.mxu0 0
      %637 = vmatprep.subr.bf16.mxu0 0
      %638 = vmatpush2.bf16.msra.mxu0 0
      %639 = vmatprep.subr.bf16.mxu0 0
      %640 = vmatpush2.bf16.msra.mxu0 0
      %641 = vmatprep.subr.bf16.mxu0 0
      %642 = vmatpush2.bf16.msra.mxu0 0
      %643 = vmatprep.subr.bf16.mxu0 0
      %644 = vmatpush2.bf16.msra.mxu0 0
      %645 = vmatprep.subr.bf16.mxu0 0
      %646 = vmatpush2.bf16.msra.mxu0 0
      %647 = vmatprep.mubr.bf16.mxu0 0
      %648 = vmatmul.mubr.bf16.gmra.mxu0 %v487
      %v649 = vpop.f32.mrf.mxu0
      %v650 = vadd.f32 %v565, %v649
      %v651 = vpop.f32.mrf.mxu0
      %v652 = vpop.f32.mrf.mxu0
      %v653 = vadd.f32 %v565, %v652
      %v654 = vpop.f32.mrf.mxu0
      %655 = vmatprep.mubr.bf16.mxu0 0
      %656 = vmatmul.mubr.bf16.gmra.mxu0 %v488
      %v657 = vpop.f32.mrf.mxu0
      %v658 = vadd.f32 %v565, %v657
      %v659 = vpop.f32.mrf.mxu0
      %v660 = vpop.f32.mrf.mxu0
      %v661 = vadd.f32 %v565, %v660
      %v662 = vpop.f32.mrf.mxu0
      %663 = vdwg.mxu0
      %v664 = vmax.f32 %v650, 0.0
      %v665 = vmax.f32 %v653, 0.0
      %v666 = vmax.f32 %v658, 0.0
      %v667 = vmax.f32 %v661, 0.0
      %v668 = vpack.c.bf16 %v665, %v664
      %v669 = vpack.c.bf16 %v667, %v666
      %670 = vmatprep.subr.bf16.mxu0 0
      %671 = vmatpush1.bf16.msra.mxu0 %v606
      %672 = vmatprep.subr.bf16.mxu0 0
      %673 = vmatpush1.bf16.msra.mxu0 %v605
      %674 = vmatprep.subr.bf16.mxu0 0
      %675 = vmatpush1.bf16.msra.mxu0 %v604
      %676 = vmatprep.subr.bf16.mxu0 0
      %677 = vmatpush1.bf16.msra.mxu0 %v603
      %678 = vmatprep.subr.bf16.mxu0 0
      %679 = vmatpush1.bf16.msra.mxu0 %v602
      %680 = vmatprep.subr.bf16.mxu0 0
      %681 = vmatpush1.bf16.msra.mxu0 %v601
      %682 = vmatprep.subr.bf16.mxu0 0
      %683 = vmatpush1.bf16.msra.mxu0 %v600
      %684 = vmatprep.subr.bf16.mxu0 0
      %685 = vmatpush1.bf16.msra.mxu0 %v599
      %686 = vmatprep.subr.bf16.mxu0 0
      %687 = vmatpush2.bf16.msra.mxu0 0
      %688 = vmatprep.subr.bf16.mxu0 0
      %689 = vmatpush2.bf16.msra.mxu0 0
      %690 = vmatprep.subr.bf16.mxu0 0
      %691 = vmatpush2.bf16.msra.mxu0 0
      %692 = vmatprep.subr.bf16.mxu0 0
      %693 = vmatpush2.bf16.msra.mxu0 0
      %694 = vmatprep.subr.bf16.mxu0 0
      %695 = vmatpush2.bf16.msra.mxu0 0
      %696 = vmatprep.subr.bf16.mxu0 0
      %697 = vmatpush2.bf16.msra.mxu0 0
      %698 = vmatprep.subr.bf16.mxu0 0
      %699 = vmatpush2.bf16.msra.mxu0 0
      %700 = vmatprep.subr.bf16.mxu0 0
      %701 = vmatpush2.bf16.msra.mxu0 0
      %702 = vmatprep.mubr.bf16.mxu0 0
      %703 = vmatmul.mubr.bf16.gmra.mxu0 %v542
      %v704 = vpop.f32.mrf.mxu0
      %v705 = vadd.f32 %v565, %v704
      %v706 = vpop.f32.mrf.mxu0
      %v707 = vpop.f32.mrf.mxu0
      %v708 = vadd.f32 %v565, %v707
      %v709 = vpop.f32.mrf.mxu0
      %710 = vmatprep.mubr.bf16.mxu0 0
      %711 = vmatmul.mubr.bf16.gmra.mxu0 %v543
      %v712 = vpop.f32.mrf.mxu0
      %v713 = vadd.f32 %v565, %v712
      %v714 = vpop.f32.mrf.mxu0
      %v715 = vpop.f32.mrf.mxu0
      %v716 = vadd.f32 %v565, %v715
      %v717 = vpop.f32.mrf.mxu0
      %718 = vdwg.mxu0
      %v719 = vmax.f32 %v705, 0.0
      %v720 = vmax.f32 %v708, 0.0
      %v721 = vmax.f32 %v713, 0.0
      %v722 = vmax.f32 %v716, 0.0
      %v723 = vpack.c.bf16 %v720, %v719
      %v724 = vpack.c.bf16 %v722, %v721
      %v725 = vld [vmem:[%s5] sm:$0xf]
      %v726 = vld [vmem:[%s5 + $0x4] sm:$0xf]
      %v727 = vld [vmem:[%s5 + $0x8] sm:$0xf]
      %v728 = vld [vmem:[%s5 + $0xc] sm:$0xf]
      %v729 = vld [vmem:[%s5 + $0x10] sm:$0xf]
      %v730 = vld [vmem:[%s5 + $0x14] sm:$0xf]
      %v731 = vld [vmem:[%s5 + $0x18] sm:$0xf]
      %v732 = vld [vmem:[%s5 + $0x1c] sm:$0xf]
      %v733 = vld [vmem:[%s5 + $0x20] sm:$0xf]
      %v734 = vld [vmem:[%s5 + $0x24] sm:$0xf]
      %v735 = vld [vmem:[%s5 + $0x28] sm:$0xf]
      %v736 = vld [vmem:[%s5 + $0x2c] sm:$0xf]
      %v737 = vld [vmem:[%s5 + $0x30] sm:$0xf]
      %v738 = vld [vmem:[%s5 + $0x34] sm:$0xf]
      %v739 = vld [vmem:[%s5 + $0x38] sm:$0xf]
      %v740 = vld [vmem:[%s5 + $0x3c] sm:$0xf]
      %v741 = vld [vmem:[%s6] sm:$0x1]
      %v743 = vlaneseq
      %v744 = vshrl.u32 %v743, 7
      %v745 = vsub.s32 0, %v744
      %v746 = vrot.slane %v741, %v745
      %v764 = vunpack.c.l.b16 %v725
      %v765 = vunpack.c.l.b16 %v726
      %v766 = vunpack.c.l.b16 %v727
      %v767 = vunpack.c.l.b16 %v728
      %v768 = vunpack.c.l.b16 %v729
      %v769 = vunpack.c.l.b16 %v730
      %v770 = vunpack.c.l.b16 %v731
      %v771 = vunpack.c.l.b16 %v732
      %v772 = vunpack.c.l.b16 %v733
      %v773 = vunpack.c.l.b16 %v734
      %v774 = vunpack.c.l.b16 %v735
      %v775 = vunpack.c.l.b16 %v736
      %v776 = vunpack.c.l.b16 %v737
      %v777 = vunpack.c.l.b16 %v738
      %v778 = vunpack.c.l.b16 %v739
      %v779 = vunpack.c.l.b16 %v740
      %v780 = vpack.c.b16 %v765, %v764
      %v781 = vpack.c.b16 %v767, %v766
      %v782 = vpack.c.b16 %v769, %v768
      %v783 = vpack.c.b16 %v771, %v770
      %v784 = vpack.c.b16 %v773, %v772
      %v785 = vpack.c.b16 %v775, %v774
      %v786 = vpack.c.b16 %v777, %v776
      %v787 = vpack.c.b16 %v779, %v778
      %796 = vmatprep.subr.bf16.mxu0 0
      %797 = vmatpush1.bf16.msra.mxu0 %v787
      %798 = vmatprep.subr.bf16.mxu0 0
      %799 = vmatpush1.bf16.msra.mxu0 %v786
      %800 = vmatprep.subr.bf16.mxu0 0
      %801 = vmatpush1.bf16.msra.mxu0 %v785
      %802 = vmatprep.subr.bf16.mxu0 0
      %803 = vmatpush1.bf16.msra.mxu0 %v784
      %804 = vmatprep.subr.bf16.mxu0 0
      %805 = vmatpush1.bf16.msra.mxu0 %v783
      %806 = vmatprep.subr.bf16.mxu0 0
      %807 = vmatpush1.bf16.msra.mxu0 %v782
      %808 = vmatprep.subr.bf16.mxu0 0
      %809 = vmatpush1.bf16.msra.mxu0 %v781
      %810 = vmatprep.subr.bf16.mxu0 0
      %811 = vmatpush1.bf16.msra.mxu0 %v780
      %812 = vmatprep.subr.bf16.mxu0 0
      %813 = vmatpush2.bf16.msra.mxu0 0
      %814 = vmatprep.subr.bf16.mxu0 0
      %815 = vmatpush2.bf16.msra.mxu0 0
      %816 = vmatprep.subr.bf16.mxu0 0
      %817 = vmatpush2.bf16.msra.mxu0 0
      %818 = vmatprep.subr.bf16.mxu0 0
      %819 = vmatpush2.bf16.msra.mxu0 0
      %820 = vmatprep.subr.bf16.mxu0 0
      %821 = vmatpush2.bf16.msra.mxu0 0
      %822 = vmatprep.subr.bf16.mxu0 0
      %823 = vmatpush2.bf16.msra.mxu0 0
      %824 = vmatprep.subr.bf16.mxu0 0
      %825 = vmatpush2.bf16.msra.mxu0 0
      %826 = vmatprep.subr.bf16.mxu0 0
      %827 = vmatpush2.bf16.msra.mxu0 0
      %828 = vmatprep.mubr.bf16.mxu0 0
      %829 = vmatmul.mubr.bf16.gmra.mxu0 %v668
      %v830 = vpop.f32.mrf.mxu0
      %v831 = vadd.f32 %v746, %v830
      %v832 = vpop.f32.mrf.mxu0
      %v833 = vpop.f32.mrf.mxu0
      %v834 = vadd.f32 %v746, %v833
      %v835 = vpop.f32.mrf.mxu0
      %836 = vmatprep.mubr.bf16.mxu0 0
      %837 = vmatmul.mubr.bf16.gmra.mxu0 %v669
      %v838 = vpop.f32.mrf.mxu0
      %v839 = vadd.f32 %v746, %v838
      %v840 = vpop.f32.mrf.mxu0
      %v841 = vpop.f32.mrf.mxu0
      %v842 = vadd.f32 %v746, %v841
      %v843 = vpop.f32.mrf.mxu0
      %844 = vdwg.mxu0
      %v845 = vmax.f32 %v831, 0.0
      %v846 = vmax.f32 %v834, 0.0
      %v847 = vmax.f32 %v839, 0.0
      %v848 = vmax.f32 %v842, 0.0
      %v849 = vpack.c.bf16 %v846, %v845
      %v850 = vpack.c.bf16 %v848, %v847
      %851 = vmatprep.subr.bf16.mxu0 0
      %852 = vmatpush1.bf16.msra.mxu0 %v787
      %853 = vmatprep.subr.bf16.mxu0 0
      %854 = vmatpush1.bf16.msra.mxu0 %v786
      %855 = vmatprep.subr.bf16.mxu0 0
      %856 = vmatpush1.bf16.msra.mxu0 %v785
      %857 = vmatprep.subr.bf16.mxu0 0
      %858 = vmatpush1.bf16.msra.mxu0 %v784
      %859 = vmatprep.subr.bf16.mxu0 0
      %860 = vmatpush1.bf16.msra.mxu0 %v783
      %861 = vmatprep.subr.bf16.mxu0 0
      %862 = vmatpush1.bf16.msra.mxu0 %v782
      %863 = vmatprep.subr.bf16.mxu0 0
      %864 = vmatpush1.bf16.msra.mxu0 %v781
      %865 = vmatprep.subr.bf16.mxu0 0
      %866 = vmatpush1.bf16.msra.mxu0 %v780
      %867 = vmatprep.subr.bf16.mxu0 0
      %868 = vmatpush2.bf16.msra.mxu0 0
      %869 = vmatprep.subr.bf16.mxu0 0
      %870 = vmatpush2.bf16.msra.mxu0 0
      %871 = vmatprep.subr.bf16.mxu0 0
      %872 = vmatpush2.bf16.msra.mxu0 0
      %873 = vmatprep.subr.bf16.mxu0 0
      %874 = vmatpush2.bf16.msra.mxu0 0
      %875 = vmatprep.subr.bf16.mxu0 0
      %876 = vmatpush2.bf16.msra.mxu0 0
      %877 = vmatprep.subr.bf16.mxu0 0
      %878 = vmatpush2.bf16.msra.mxu0 0
      %879 = vmatprep.subr.bf16.mxu0 0
      %880 = vmatpush2.bf16.msra.mxu0 0
      %881 = vmatprep.subr.bf16.mxu0 0
      %882 = vmatpush2.bf16.msra.mxu0 0
      %883 = vmatprep.mubr.bf16.mxu0 0
      %884 = vmatmul.mubr.bf16.gmra.mxu0 %v723
      %v885 = vpop.f32.mrf.mxu0
      %v886 = vadd.f32 %v746, %v885
      %v887 = vpop.f32.mrf.mxu0
      %v888 = vpop.f32.mrf.mxu0
      %v889 = vadd.f32 %v746, %v888
      %v890 = vpop.f32.mrf.mxu0
      %891 = vmatprep.mubr.bf16.mxu0 0
      %892 = vmatmul.mubr.bf16.gmra.mxu0 %v724
      %v893 = vpop.f32.mrf.mxu0
      %v894 = vadd.f32 %v746, %v893
      %v895 = vpop.f32.mrf.mxu0
      %v896 = vpop.f32.mrf.mxu0
      %v897 = vadd.f32 %v746, %v896
      %v898 = vpop.f32.mrf.mxu0
      %899 = vdwg.mxu0
      %v900 = vmax.f32 %v886, 0.0
      %v901 = vmax.f32 %v889, 0.0
      %v902 = vmax.f32 %v894, 0.0
      %v903 = vmax.f32 %v897, 0.0
      %v904 = vpack.c.bf16 %v901, %v900
      %v905 = vpack.c.bf16 %v903, %v902
      %v906 = vld [vmem:[%s7] sm:$0xf]
      %v907 = vld [vmem:[%s7 + $0x4] sm:$0xf]
      %v908 = vld [vmem:[%s7 + $0x8] sm:$0xf]
      %v909 = vld [vmem:[%s7 + $0xc] sm:$0xf]
      %v910 = vld [vmem:[%s7 + $0x10] sm:$0xf]
      %v911 = vld [vmem:[%s7 + $0x14] sm:$0xf]
      %v912 = vld [vmem:[%s7 + $0x18] sm:$0xf]
      %v913 = vld [vmem:[%s7 + $0x1c] sm:$0xf]
      %v914 = vld [vmem:[%s7 + $0x20] sm:$0xf]
      %v915 = vld [vmem:[%s7 + $0x24] sm:$0xf]
      %v916 = vld [vmem:[%s7 + $0x28] sm:$0xf]
      %v917 = vld [vmem:[%s7 + $0x2c] sm:$0xf]
      %v918 = vld [vmem:[%s7 + $0x30] sm:$0xf]
      %v919 = vld [vmem:[%s7 + $0x34] sm:$0xf]
      %v920 = vld [vmem:[%s7 + $0x38] sm:$0xf]
      %v921 = vld [vmem:[%s7 + $0x3c] sm:$0xf]
      %v922 = vld [vmem:[%s8] sm:$0x1]
      %v923 = vsel %vm343, %v337, 0.0
      %v924 = vsel %vm343, %v338, 0.0
      %v925 = vsel %vm343, %v339, 0.0
      %v926 = vsel %vm343, %v340, 0.0
      %v928 = vlaneseq
      %v929 = vshrl.u32 %v928, 7
      %v930 = vsub.s32 0, %v929
      %v931 = vrot.slane %v922, %v930
      %v949 = vunpack.c.l.b16 %v906
      %v950 = vunpack.c.l.b16 %v907
      %v951 = vunpack.c.l.b16 %v908
      %v952 = vunpack.c.l.b16 %v909
      %v953 = vunpack.c.l.b16 %v910
      %v954 = vunpack.c.l.b16 %v911
      %v955 = vunpack.c.l.b16 %v912
      %v956 = vunpack.c.l.b16 %v913
      %v957 = vunpack.c.l.b16 %v914
      %v958 = vunpack.c.l.b16 %v915
      %v959 = vunpack.c.l.b16 %v916
      %v960 = vunpack.c.l.b16 %v917
      %v961 = vunpack.c.l.b16 %v918
      %v962 = vunpack.c.l.b16 %v919
      %v963 = vunpack.c.l.b16 %v920
      %v964 = vunpack.c.l.b16 %v921
      %v965 = vpack.c.b16 %v950, %v949
      %v966 = vpack.c.b16 %v952, %v951
      %v967 = vpack.c.b16 %v954, %v953
      %v968 = vpack.c.b16 %v956, %v955
      %v969 = vpack.c.b16 %v958, %v957
      %v970 = vpack.c.b16 %v960, %v959
      %v971 = vpack.c.b16 %v962, %v961
      %v972 = vpack.c.b16 %v964, %v963
      %981 = vmatprep.subr.bf16.mxu0 0
      %982 = vmatpush1.bf16.msra.mxu0 %v972
      %983 = vmatprep.subr.bf16.mxu0 0
      %984 = vmatpush1.bf16.msra.mxu0 %v971
      %985 = vmatprep.subr.bf16.mxu0 0
      %986 = vmatpush1.bf16.msra.mxu0 %v970
      %987 = vmatprep.subr.bf16.mxu0 0
      %988 = vmatpush1.bf16.msra.mxu0 %v969
      %989 = vmatprep.subr.bf16.mxu0 0
      %990 = vmatpush1.bf16.msra.mxu0 %v968
      %991 = vmatprep.subr.bf16.mxu0 0
      %992 = vmatpush1.bf16.msra.mxu0 %v967
      %993 = vmatprep.subr.bf16.mxu0 0
      %994 = vmatpush1.bf16.msra.mxu0 %v966
      %995 = vmatprep.subr.bf16.mxu0 0
      %996 = vmatpush1.bf16.msra.mxu0 %v965
      %997 = vmatprep.subr.bf16.mxu0 0
      %998 = vmatpush2.bf16.msra.mxu0 0
      %999 = vmatprep.subr.bf16.mxu0 0
      %1000 = vmatpush2.bf16.msra.mxu0 0
      %1001 = vmatprep.subr.bf16.mxu0 0
      %1002 = vmatpush2.bf16.msra.mxu0 0
      %1003 = vmatprep.subr.bf16.mxu0 0
      %1004 = vmatpush2.bf16.msra.mxu0 0
      %1005 = vmatprep.subr.bf16.mxu0 0
      %1006 = vmatpush2.bf16.msra.mxu0 0
      %1007 = vmatprep.subr.bf16.mxu0 0
      %1008 = vmatpush2.bf16.msra.mxu0 0
      %1009 = vmatprep.subr.bf16.mxu0 0
      %1010 = vmatpush2.bf16.msra.mxu0 0
      %1011 = vmatprep.subr.bf16.mxu0 0
      %1012 = vmatpush2.bf16.msra.mxu0 0
      %1013 = vmatprep.mubr.bf16.mxu0 0
      %1014 = vmatmul.mubr.bf16.gmra.mxu0 %v849
      %v1015 = vpop.f32.mrf.mxu0
      %v1016 = vadd.f32 %v931, %v1015
      %v1017 = vpop.f32.mrf.mxu0
      %v1018 = vpop.f32.mrf.mxu0
      %v1019 = vadd.f32 %v931, %v1018
      %v1020 = vpop.f32.mrf.mxu0
      %1021 = vmatprep.mubr.bf16.mxu0 0
      %1022 = vmatmul.mubr.bf16.gmra.mxu0 %v850
      %v1023 = vpop.f32.mrf.mxu0
      %v1024 = vadd.f32 %v931, %v1023
      %v1025 = vpop.f32.mrf.mxu0
      %v1026 = vpop.f32.mrf.mxu0
      %v1027 = vadd.f32 %v931, %v1026
      %v1028 = vpop.f32.mrf.mxu0
      %1029 = vdwg.mxu0
      %v1030 = vadd.f32 %v1016, %v923
      %v1031 = vadd.f32 %v1019, %v924
      %v1032 = vadd.f32 %v1024, %v925
      %v1033 = vadd.f32 %v1027, %v926
      %1034 = vst [vmem:[%s334] sm:$0xff] %v1030
      %1035 = vst [vmem:[%s334 + $0x8] sm:$0xff] %v1031
      %1036 = vst [vmem:[%s334 + $0x10] sm:$0xff] %v1032
      %1037 = vst [vmem:[%s334 + $0x18] sm:$0xff] %v1033
      %v1038 = vld [vmem:[%s328 + $0x20] sm:$0xff]
      %v1039 = vld [vmem:[%s328 + $0x28] sm:$0xff]
      %v1040 = vld [vmem:[%s328 + $0x30] sm:$0xff]
      %v1041 = vld [vmem:[%s328 + $0x38] sm:$0xff]
      %v1042 = vsel %vm343, %v1038, 0.0
      %v1043 = vsel %vm343, %v1039, 0.0
      %v1044 = vsel %vm343, %v1040, 0.0
      %v1045 = vsel %vm343, %v1041, 0.0
      %1046 = vmatprep.subr.bf16.mxu0 0
      %1047 = vmatpush1.bf16.msra.mxu0 %v972
      %1048 = vmatprep.subr.bf16.mxu0 0
      %1049 = vmatpush1.bf16.msra.mxu0 %v971
      %1050 = vmatprep.subr.bf16.mxu0 0
      %1051 = vmatpush1.bf16.msra.mxu0 %v970
      %1052 = vmatprep.subr.bf16.mxu0 0
      %1053 = vmatpush1.bf16.msra.mxu0 %v969
      %1054 = vmatprep.subr.bf16.mxu0 0
      %1055 = vmatpush1.bf16.msra.mxu0 %v968
      %1056 = vmatprep.subr.bf16.mxu0 0
      %1057 = vmatpush1.bf16.msra.mxu0 %v967
      %1058 = vmatprep.subr.bf16.mxu0 0
      %1059 = vmatpush1.bf16.msra.mxu0 %v966
      %1060 = vmatprep.subr.bf16.mxu0 0
      %1061 = vmatpush1.bf16.msra.mxu0 %v965
      %1062 = vmatprep.subr.bf16.mxu0 0
      %1063 = vmatpush2.bf16.msra.mxu0 0
      %1064 = vmatprep.subr.bf16.mxu0 0
      %1065 = vmatpush2.bf16.msra.mxu0 0
      %1066 = vmatprep.subr.bf16.mxu0 0
      %1067 = vmatpush2.bf16.msra.mxu0 0
      %1068 = vmatprep.subr.bf16.mxu0 0
      %1069 = vmatpush2.bf16.msra.mxu0 0
      %1070 = vmatprep.subr.bf16.mxu0 0
      %1071 = vmatpush2.bf16.msra.mxu0 0
      %1072 = vmatprep.subr.bf16.mxu0 0
      %1073 = vmatpush2.bf16.msra.mxu0 0
      %1074 = vmatprep.subr.bf16.mxu0 0
      %1075 = vmatpush2.bf16.msra.mxu0 0
      %1076 = vmatprep.subr.bf16.mxu0 0
      %1077 = vmatpush2.bf16.msra.mxu0 0
      %1078 = vmatprep.mubr.bf16.mxu0 0
      %1079 = vmatmul.mubr.bf16.gmra.mxu0 %v904
      %v1080 = vpop.f32.mrf.mxu0
      %v1081 = vadd.f32 %v931, %v1080
      %v1082 = vpop.f32.mrf.mxu0
      %v1083 = vpop.f32.mrf.mxu0
      %v1084 = vadd.f32 %v931, %v1083
      %v1085 = vpop.f32.mrf.mxu0
      %1086 = vmatprep.mubr.bf16.mxu0 0
      %1087 = vmatmul.mubr.bf16.gmra.mxu0 %v905
      %v1088 = vpop.f32.mrf.mxu0
      %v1089 = vadd.f32 %v931, %v1088
      %v1090 = vpop.f32.mrf.mxu0
      %v1091 = vpop.f32.mrf.mxu0
      %v1092 = vadd.f32 %v931, %v1091
      %v1093 = vpop.f32.mrf.mxu0
      %1094 = vdwg.mxu0
      %v1095 = vadd.f32 %v1081, %v1042
      %v1096 = vadd.f32 %v1084, %v1043
      %v1097 = vadd.f32 %v1089, %v1044
      %v1098 = vadd.f32 %v1092, %v1045
      %1099 = vst [vmem:[%s334 + $0x20] sm:$0xff] %v1095
      %1100 = vst [vmem:[%s334 + $0x28] sm:$0xff] %v1096
      %1101 = vst [vmem:[%s334 + $0x30] sm:$0xff] %v1097
      %1102 = vst [vmem:[%s334 + $0x38] sm:$0xff] %v1098
      %s1103 = smul.u32 8, %s20
      %p1104 = scmp.lt.s32.totalorder %s1103, 31
      %s1105 = scalar_select %p1104, %s1103, 31
      %s1106 = smul.addr %s1105, 8
      %s1107 = scalar_lea.vmem %s9, %s1106
      // Predicated region
      $region57: #{resnet_block.1} parent=55 // pred_check
        %p1108 = pneg %p232
      $region58: #{resnet_block.1} parent=55 // pred_check_branch
        %1110 = sbr.rel (%p1108) target = $region60
      $region59: #{resnet_block.1} parent=55 // pred_region
        %s1111 = smul.u32 8, %s20
      $region60: #{resnet_block.1} parent=55 // pred_fallthru
        _
    $region56: #{resnet_block.1} parent=5 // pred_fallthru
      _
    %p1112 = scmp.le.s32.totalorder 2, %s15
    // Predicated region
    $region61: #{resnet_block.1} parent=5 // pred_check
      %p1113 = pneg %p1112
    $region62: #{resnet_block.1} parent=5 // pred_check_branch
      %1115 = sbr.rel (%p1113) target = $region64
    $region63: #{resnet_block.1} parent=5 // pred_region
      %s1116 = ssub.s32 %s15, 2
      // Predicated region
      $region65: #{resnet_block.1} parent=63 // pred_check
        %p1117 = pneg %p238
      $region66: #{resnet_block.1} parent=63 // pred_check_branch
        %1119 = sbr.rel (%p1117) target = $region68
      $region67: #{resnet_block.1} parent=63 // pred_region
        %s1120 = smul.u32 8, %s21
        %p1121 = scmp.lt.s32.totalorder %s1120, 31
        %s1122 = scalar_select %p1121, %s1120, 31
        %s1123 = smul.addr %s1122, 8
        %s1124 = scalar_lea.vmem %s9, %s1123
      $region68: #{resnet_block.1} parent=63 // pred_fallthru
        _
    $region64: #{resnet_block.1} parent=5 // pred_fallthru
      _
  $region6: #{resnet_block.1} parent=0 // loop_footer
    %s19 = sadd.s32 1, %s15
  $region7: #{resnet_block.1} parent=0 // loop_footer_branch
    %14 = sbr.rel target = $region3
  $region8: #{resnet_block.1} parent=0 // loop_exit
    _

</llo_original>
